<compile_context>
chip_gen: v7x
topology: tpu7x:2x2x1
jax: 0.10.0
libtpu: 0.0.40
codegen_flags: <defaults>
</compile_context>

<pallas_src>
import functools

import jax
import jax.numpy as jnp
from jax import lax
from jax.experimental import pallas as pl
from jax.experimental.pallas import tpu as pltpu

LANE = 128      # lane width (last-dim vreg tiling)
SUBLANE = 8     # sublane width (second-to-last-dim vreg tiling)


def qnet_kernel(x_ref, w1b_ref, w23_ref, o_ref, *, state_dim, hidden, n_pad):
    x = x_ref[...]                                     # (tile_b, K) f32

    # ---- Layer 1 on the VPU: K broadcast FMAs (K tiny, e.g. 4) + bias ----
    h1 = x[:, 0:1] * w1b_ref[0:1, :hidden] + w1b_ref[state_dim:state_dim + 1, :hidden]
    for k in range(1, state_dim):                      # static unrolled loop
        h1 = h1 + x[:, k:k + 1] * w1b_ref[k:k + 1, :hidden]
    h1 = jnp.maximum(h1, 0.0).astype(jnp.bfloat16)

    # ---- Layer 2 (MXU): Linear + bias + ReLU ----
    h2 = jnp.dot(h1, w23_ref[:, :hidden], preferred_element_type=jnp.float32)
    h2 = h2 + w1b_ref[state_dim + 1:state_dim + 2, :hidden]
    h2 = jnp.maximum(h2, 0.0).astype(jnp.bfloat16)

    # ---- Output layer (MXU): Linear + bias, lane-dense 128-wide Q slab ----
    q = jnp.dot(h2, w23_ref[:, hidden:hidden + n_pad],
                preferred_element_type=jnp.float32)
    o_ref[...] = (q + w1b_ref[state_dim + 2:state_dim + 3, :n_pad]).astype(o_ref.dtype)


def prepare_params(params):
    """One-time packing of f32 master params into the kernel's resident layout.

    Returns (w1b, w23, meta):
      w1b: (state_dim + 3, W) f32  -- rows [0:K]=w1, K=b1, K+1=b2, K+2=b3 (0-padded)
      w23: (hidden, hidden + n_pad) bf16 -- [w2 | w3 zero-padded to n_pad columns]
    Do this once (outside the training / acting loop) and reuse the result.
    """
    w1, b1, w2, b2, w3, b3 = params
    state_dim, hidden = w1.shape
    n_actions = w3.shape[1]
    assert hidden % LANE == 0, "hidden must be a multiple of 128 for lane-aligned slices"
    n_pad = (-(-n_actions // LANE)) * LANE
    width = max(hidden, n_pad)

    w1b = jnp.zeros((state_dim + 3, width), jnp.float32)
    w1b = w1b.at[:state_dim, :hidden].set(w1)
    w1b = w1b.at[state_dim, :hidden].set(b1.reshape(-1))
    w1b = w1b.at[state_dim + 1, :hidden].set(b2.reshape(-1))
    w1b = w1b.at[state_dim + 2, :n_actions].set(b3.reshape(-1))

    w23 = jnp.zeros((hidden, hidden + n_pad), jnp.bfloat16)
    w23 = w23.at[:, :hidden].set(w2.astype(jnp.bfloat16))
    w23 = w23.at[:, hidden:hidden + n_actions].set(w3.astype(jnp.bfloat16))

    meta = dict(state_dim=state_dim, hidden=hidden, n_actions=n_actions, n_pad=n_pad)
    return w1b, w23, meta


def _num_tensorcores():
    """2 TensorCores per chip on v7x, 1 on v5e/v6e."""
    try:
        kind = jax.devices()[0].device_kind.lower()
    except Exception:
        return 1
    return 2 if "v7" in kind else 1


def _pick_grid_steps(batch, n_cores):
    # Grid steps are a serial loop per TensorCore: use exactly one step per
    # core for small batches, tile_b ~512 (rounded to a multiple of n_cores
    # steps) for larger replay batches.
    if batch <= 512 * n_cores:
        return n_cores
    steps = -(-batch // 512)
    return -(-steps // n_cores) * n_cores


def q_net_forward(x, w1b, w23, meta, *, num_steps=None):
    """Fused MLP forward. x: (B, state_dim) f32 -> (B, n_actions) f32."""
    B, state_dim = x.shape
    assert state_dim == meta["state_dim"]
    hidden, n_actions, n_pad = meta["hidden"], meta["n_actions"], meta["n_pad"]

    if num_steps is None:
        num_steps = _pick_grid_steps(B, _num_tensorcores())
    quantum = num_steps * SUBLANE
    Bp = (-(-B // quantum)) * quantum
    tile_b = Bp // num_steps
    x_p = x if Bp == B else jnp.pad(x, ((0, Bp - B), (0, 0)))

    # Weights/biases: one full-array block each, VMEM-resident across all steps.
    resident = lambda a: pl.BlockSpec(a.shape, lambda i: (0, 0))

    flops = 2 * Bp * (state_dim * hidden + hidden * hidden + hidden * n_pad)
    bytes_accessed = x_p.size * 4 + w1b.size * 4 + w23.size * 2 + Bp * n_pad * 4

    kernel = functools.partial(
        qnet_kernel, state_dim=state_dim, hidden=hidden, n_pad=n_pad)

    out = pl.pallas_call(
        kernel,
        out_shape=jax.ShapeDtypeStruct((Bp, n_pad), jnp.float32),
        grid=(num_steps,),
        in_specs=[
            pl.BlockSpec((tile_b, state_dim), lambda i: (i, 0)),  # x: tiled over batch
            resident(w1b),
            resident(w23),
        ],
        out_specs=pl.BlockSpec((tile_b, n_pad), lambda i: (i, 0)),
        compiler_params=pltpu.CompilerParams(
            dimension_semantics=("parallel",),   # megacore sharding on v7x
        ),
        cost_estimate=pl.CostEstimate(
            flops=flops, transcendentals=0, bytes_accessed=bytes_accessed),
    )(x_p, w1b, w23)

    # Padded batch rows / padded action columns carry garbage; always slice.
    return out[:B, :n_actions]


def init_params(key, state_dim, hidden, n_actions):
    """Deterministic synthetic parameters (Kaiming-ish scaling), f32 masters."""
    ks = jax.random.split(key, 6)
    w1 = jax.random.normal(ks[0], (state_dim, hidden), jnp.float32) / jnp.sqrt(state_dim)
    b1 = jax.random.normal(ks[1], (hidden,), jnp.float32) * 0.01
    w2 = jax.random.normal(ks[2], (hidden, hidden), jnp.float32) / jnp.sqrt(hidden)
    b2 = jax.random.normal(ks[3], (hidden,), jnp.float32) * 0.01
    w3 = jax.random.normal(ks[4], (hidden, n_actions), jnp.float32) / jnp.sqrt(hidden)
    b3 = jax.random.normal(ks[5], (n_actions,), jnp.float32) * 0.01
    return (w1, b1, w2, b2, w3, b3)


def q_net_reference(x, params):
    """Pure-JAX reference at matching precision (f32 layer-1, bf16 MXU layers)."""
    w1, b1, w2, b2, w3, b3 = params
    h1 = jnp.dot(x, w1, precision=lax.Precision.HIGHEST) + b1
    h1 = jnp.maximum(h1, 0.0).astype(jnp.bfloat16)
    h2 = jnp.dot(h1, w2.astype(jnp.bfloat16), preferred_element_type=jnp.float32) + b2
    h2 = jnp.maximum(h2, 0.0).astype(jnp.bfloat16)
    return jnp.dot(h2, w3.astype(jnp.bfloat16), preferred_element_type=jnp.float32) + b3


if __name__ == "__main__":
    key = jax.random.PRNGKey(0)
    k_x, k_p = jax.random.split(key)

    # CartPole-style DQN shapes; batch sized like a small replay minibatch.
    B, STATE_DIM, HIDDEN, N_ACTIONS = 256, 4, 128, 2

    x = jax.random.normal(k_x, (B, STATE_DIM), jnp.float32)
    params = init_params(k_p, STATE_DIM, HIDDEN, N_ACTIONS)

    # One-time parameter packing (hoisted out of the per-call forward).
    w1b, w23, meta = prepare_params(params)
    (w1b, w23) = jax.block_until_ready((w1b, w23))

    q = q_net_forward(x, w1b, w23, meta)
    q = jax.block_until_ready(q)

    q_ref = q_net_reference(x, params)
    assert q.shape == (B, N_ACTIONS)
    # bf16 MXU layers with f32 accumulate: relax tolerance accordingly.
    assert jnp.allclose(q, q_ref, atol=1e-2, rtol=1e-2)

    print("KERNEL_OK")
</pallas_src>

<mosaic_0001>
module attributes {stable_mosaic.version = 11 : i64} {
  func.func @qnet_kernel(%arg0: i32, %arg1: memref<256x4xf32, #tpu.memory_space<vmem>>, %arg2: memref<7x128xf32, #tpu.memory_space<vmem>>, %arg3: memref<128x256xbf16, #tpu.memory_space<vmem>>, %arg4: memref<256x128xf32, #tpu.memory_space<vmem>>) attributes {dimension_semantics = [#tpu.dimension_semantics<parallel>], iteration_bounds = array<i64: 1>, scalar_prefetch = 0 : i64, scratch_operands = 0 : i64, tpu.core_type = #tpu.core_type<tc>, window_params = [{transform_indices = @transform_0, window_bounds = array<i64: 256, 4>}, {pipeline_mode = #tpu.pipeline_mode<synchronous>, transform_indices = @transform_1, window_bounds = array<i64: 7, 128>}, {pipeline_mode = #tpu.pipeline_mode<synchronous>, transform_indices = @transform_2, window_bounds = array<i64: 128, 256>}, {transform_indices = @transform_3, window_bounds = array<i64: 256, 128>}]} {
    %c0 = arith.constant 0 : index
    %c0_0 = arith.constant 0 : index
    %0 = vector.load %arg1[%c0, %c0_0] : memref<256x4xf32, #tpu.memory_space<vmem>>, vector<256x4xf32>
    %1 = vector.extract_strided_slice %0 {offsets = [0, 0], sizes = [256, 1], strides = [1, 1]} : vector<256x4xf32> to vector<256x1xf32>
    %c0_1 = arith.constant 0 : index
    %c0_2 = arith.constant 0 : index
    %2 = vector.load %arg2[%c0_1, %c0_2] : memref<7x128xf32, #tpu.memory_space<vmem>>, vector<1x128xf32>
    %3 = vector.broadcast %1 : vector<256x1xf32> to vector<256x128xf32>
    %4 = vector.broadcast %2 : vector<1x128xf32> to vector<256x128xf32>
    %5 = arith.mulf %3, %4 : vector<256x128xf32>
    %c4 = arith.constant 4 : index
    %c0_3 = arith.constant 0 : index
    %6 = vector.load %arg2[%c4, %c0_3] : memref<7x128xf32, #tpu.memory_space<vmem>>, vector<1x128xf32>
    %7 = vector.broadcast %6 : vector<1x128xf32> to vector<256x128xf32>
    %8 = arith.addf %5, %7 : vector<256x128xf32>
    %9 = vector.extract_strided_slice %0 {offsets = [0, 1], sizes = [256, 1], strides = [1, 1]} : vector<256x4xf32> to vector<256x1xf32>
    %c1 = arith.constant 1 : index
    %c0_4 = arith.constant 0 : index
    %10 = vector.load %arg2[%c1, %c0_4] : memref<7x128xf32, #tpu.memory_space<vmem>>, vector<1x128xf32>
    %11 = vector.broadcast %9 : vector<256x1xf32> to vector<256x128xf32>
    %12 = vector.broadcast %10 : vector<1x128xf32> to vector<256x128xf32>
    %13 = arith.mulf %11, %12 : vector<256x128xf32>
    %14 = arith.addf %8, %13 : vector<256x128xf32>
    %15 = vector.extract_strided_slice %0 {offsets = [0, 2], sizes = [256, 1], strides = [1, 1]} : vector<256x4xf32> to vector<256x1xf32>
    %c2 = arith.constant 2 : index
    %c0_5 = arith.constant 0 : index
    %16 = vector.load %arg2[%c2, %c0_5] : memref<7x128xf32, #tpu.memory_space<vmem>>, vector<1x128xf32>
    %17 = vector.broadcast %15 : vector<256x1xf32> to vector<256x128xf32>
    %18 = vector.broadcast %16 : vector<1x128xf32> to vector<256x128xf32>
    %19 = arith.mulf %17, %18 : vector<256x128xf32>
    %20 = arith.addf %14, %19 : vector<256x128xf32>
    %21 = vector.extract_strided_slice %0 {offsets = [0, 3], sizes = [256, 1], strides = [1, 1]} : vector<256x4xf32> to vector<256x1xf32>
    %c3 = arith.constant 3 : index
    %c0_6 = arith.constant 0 : index
    %22 = vector.load %arg2[%c3, %c0_6] : memref<7x128xf32, #tpu.memory_space<vmem>>, vector<1x128xf32>
    %23 = vector.broadcast %21 : vector<256x1xf32> to vector<256x128xf32>
    %24 = vector.broadcast %22 : vector<1x128xf32> to vector<256x128xf32>
    %25 = arith.mulf %23, %24 : vector<256x128xf32>
    %26 = arith.addf %20, %25 : vector<256x128xf32>
    %cst = arith.constant 0.000000e+00 : f32
    %27 = vector.broadcast %cst : f32 to vector<256x128xf32>
    %28 = arith.maximumf %26, %27 : vector<256x128xf32>
    %29 = arith.truncf %28 : vector<256x128xf32> to vector<256x128xbf16>
    %c0_7 = arith.constant 0 : index
    %c0_8 = arith.constant 0 : index
    %30 = vector.load %arg3[%c0_7, %c0_8] : memref<128x256xbf16, #tpu.memory_space<vmem>>, vector<128x128xbf16>
    %cst_9 = arith.constant dense<0.000000e+00> : vector<256x128xf32>
    %31 = tpu.matmul %29, %30, %cst_9 {dimension_numbers = #tpu.dot_dimension_numbers<[1], [0], [0], [1], [0, 0, 1, 1], [], []>} : vector<256x128xbf16>, vector<128x128xbf16>, vector<256x128xf32> -> vector<256x128xf32>
    %c5 = arith.constant 5 : index
    %c0_10 = arith.constant 0 : index
    %32 = vector.load %arg2[%c5, %c0_10] : memref<7x128xf32, #tpu.memory_space<vmem>>, vector<1x128xf32>
    %33 = vector.broadcast %32 : vector<1x128xf32> to vector<256x128xf32>
    %34 = arith.addf %31, %33 : vector<256x128xf32>
    %cst_11 = arith.constant 0.000000e+00 : f32
    %35 = vector.broadcast %cst_11 : f32 to vector<256x128xf32>
    %36 = arith.maximumf %34, %35 : vector<256x128xf32>
    %37 = arith.truncf %36 : vector<256x128xf32> to vector<256x128xbf16>
    %c0_12 = arith.constant 0 : index
    %c128 = arith.constant 128 : index
    %38 = vector.load %arg3[%c0_12, %c128] : memref<128x256xbf16, #tpu.memory_space<vmem>>, vector<128x128xbf16>
    %cst_13 = arith.constant dense<0.000000e+00> : vector<256x128xf32>
    %39 = tpu.matmul %37, %38, %cst_13 {dimension_numbers = #tpu.dot_dimension_numbers<[1], [0], [0], [1], [0, 0, 1, 1], [], []>} : vector<256x128xbf16>, vector<128x128xbf16>, vector<256x128xf32> -> vector<256x128xf32>
    %c6 = arith.constant 6 : index
    %c0_14 = arith.constant 0 : index
    %40 = vector.load %arg2[%c6, %c0_14] : memref<7x128xf32, #tpu.memory_space<vmem>>, vector<1x128xf32>
    %41 = vector.broadcast %40 : vector<1x128xf32> to vector<256x128xf32>
    %42 = arith.addf %39, %41 : vector<256x128xf32>
    %c0_15 = arith.constant 0 : index
    %c0_16 = arith.constant 0 : index
    %43 = vector.load %arg4[%c0_15, %c0_16] : memref<256x128xf32, #tpu.memory_space<vmem>>, vector<256x128xf32>
    tpu.vector_store %arg4[%c0_15, %c0_16], %42 {strides = array<i32>} : memref<256x128xf32, #tpu.memory_space<vmem>>, vector<256x128xf32>,
    return
  }
  func.func @transform_0(%arg0: i32) -> (i32, i32) {
    %c0_i32 = arith.constant 0 : i32
    %c0_i32_0 = arith.constant 0 : i32
    return %arg0, %c0_i32 : i32, i32
  }
  func.func @transform_1(%arg0: i32) -> (i32, i32) {
    %c0_i32 = arith.constant 0 : i32
    %c0_i32_0 = arith.constant 0 : i32
    %c0_i32_1 = arith.constant 0 : i32
    return %c0_i32, %c0_i32_0 : i32, i32
  }
  func.func @transform_2(%arg0: i32) -> (i32, i32) {
    %c0_i32 = arith.constant 0 : i32
    %c0_i32_0 = arith.constant 0 : i32
    %c0_i32_1 = arith.constant 0 : i32
    return %c0_i32, %c0_i32_0 : i32, i32
  }
  func.func @transform_3(%arg0: i32) -> (i32, i32) {
    %c0_i32 = arith.constant 0 : i32
    %c0_i32_0 = arith.constant 0 : i32
    return %arg0, %c0_i32 : i32, i32
  }
}

</mosaic_0001>

<llo_original>
// kernel: tpu_custom_call.1
$region0: #{tpu_custom_call.1}
  #allocation0 [shape = 'u32[]', space=smem, size = 0x4, offset = 0x4, fixed_abs, tag = 'smem constant byte address 0x4 - core index']
  #allocation1 [shape = 'u32[144,128]{1,0:T(1,128)}', space=vmem, size = 0x12000, scoped, tag = 'internal scratch']
  %s0 = inlined_call_operand.vmem [shape: f32[256,4], index: 0, kind: input, shape index: {}]
  %s1 = inlined_call_operand.vmem [shape: f32[7,128], index: 1, kind: input, shape index: {}]
  %s2 = inlined_call_operand.vmem [shape: bf16[128,256], index: 2, kind: input, shape index: {}]
  %s3 = inlined_call_operand.hbm [shape: f32[256,128], index: 3, kind: output, shape index: {}]
  %s4 = sld [smem:[#allocation0]]
  $region22: #{tpu_custom_call.1} parent=0
    _
  %s6 = ssub.s32 1, %s4
  %s7 = scalar_select 0, %s6, %s4
  $region1: #{tpu_custom_call.1} parent=0
    #allocation2 [shape = 'u8[131072]{0}', space=vmem, size = 0x20000, scoped, tag = 'output window, operand 0, single buffered']
    #allocation3 [shape = 's32[1]{0}', space=sflag, size = 0x4, scoped, tag = 'scoped memory for tpu_custom_call.1']
    %8 = vsyncpa [#allocation3], 0
    // Predicated region
    $region2: #{tpu_custom_call.1} parent=1 // pred_check
      _
    $region3: #{tpu_custom_call.1} parent=1 // pred_check_branch
      %10 = sbr.rel (0) target = $region5
    $region4: #{tpu_custom_call.1} parent=1 // pred_region
      _
    $region5: #{tpu_custom_call.1} parent=1 // pred_fallthru
      _
    // Predicated region
    $region6: #{tpu_custom_call.1} parent=1 // pred_check
      _
    $region7: #{tpu_custom_call.1} parent=1 // pred_check_branch
      %12 = sbr.rel (0) target = $region9
    $region8: #{tpu_custom_call.1} parent=1 // pred_region
      _
    $region9: #{tpu_custom_call.1} parent=1 // pred_fallthru
      _
    // Predicated region
    $region10: #{tpu_custom_call.1} parent=1 // pred_check
      _
    $region11: #{tpu_custom_call.1} parent=1 // pred_check_branch
      %14 = sbr.rel (0) target = $region13
    $region12: #{tpu_custom_call.1} parent=1 // pred_region
      _
    $region13: #{tpu_custom_call.1} parent=1 // pred_fallthru
      _
    %v16 = vld [vmem:[%s0] sm:$0xff]
    %v17 = vld [vmem:[%s0 + $0x8] sm:$0xff]
    %v18 = vld [vmem:[%s0 + $0x10] sm:$0xff]
    %v19 = vld [vmem:[%s0 + $0x18] sm:$0xff]
    %v20 = vld [vmem:[%s0 + $0x20] sm:$0xff]
    %v21 = vld [vmem:[%s0 + $0x28] sm:$0xff]
    %v22 = vld [vmem:[%s0 + $0x30] sm:$0xff]
    %v23 = vld [vmem:[%s0 + $0x38] sm:$0xff]
    %v24 = vld [vmem:[%s0 + $0x40] sm:$0xff]
    %v25 = vld [vmem:[%s0 + $0x48] sm:$0xff]
    %v26 = vld [vmem:[%s0 + $0x50] sm:$0xff]
    %v27 = vld [vmem:[%s0 + $0x58] sm:$0xff]
    %v28 = vld [vmem:[%s0 + $0x60] sm:$0xff]
    %v29 = vld [vmem:[%s0 + $0x68] sm:$0xff]
    %v30 = vld [vmem:[%s0 + $0x70] sm:$0xff]
    %v31 = vld [vmem:[%s0 + $0x78] sm:$0xff]
    %v32 = vld [vmem:[%s0 + $0x80] sm:$0xff]
    %v33 = vld [vmem:[%s0 + $0x88] sm:$0xff]
    %v34 = vld [vmem:[%s0 + $0x90] sm:$0xff]
    %v35 = vld [vmem:[%s0 + $0x98] sm:$0xff]
    %v36 = vld [vmem:[%s0 + $0xa0] sm:$0xff]
    %v37 = vld [vmem:[%s0 + $0xa8] sm:$0xff]
    %v38 = vld [vmem:[%s0 + $0xb0] sm:$0xff]
    %v39 = vld [vmem:[%s0 + $0xb8] sm:$0xff]
    %v40 = vld [vmem:[%s0 + $0xc0] sm:$0xff]
    %v41 = vld [vmem:[%s0 + $0xc8] sm:$0xff]
    %v42 = vld [vmem:[%s0 + $0xd0] sm:$0xff]
    %v43 = vld [vmem:[%s0 + $0xd8] sm:$0xff]
    %v44 = vld [vmem:[%s0 + $0xe0] sm:$0xff]
    %v45 = vld [vmem:[%s0 + $0xe8] sm:$0xff]
    %v46 = vld [vmem:[%s0 + $0xf0] sm:$0xff]
    %v47 = vld [vmem:[%s0 + $0xf8] sm:$0xff]
    %v48 = vld [vmem:[%s1] sm:$0x1]
    %50 = vset.pattern.permute.xlu0 0
    %51 = vperm.xlu0 %50, %v16
    %v52 = vpop.permute.xlu0 %51
    %55 = vset.pattern.permute.xlu0 0
    %56 = vperm.xlu0 %55, %v17
    %v57 = vpop.permute.xlu0 %56
    %60 = vset.pattern.permute.xlu0 0
    %61 = vperm.xlu0 %60, %v18
    %v62 = vpop.permute.xlu0 %61
    %65 = vset.pattern.permute.xlu0 0
    %66 = vperm.xlu0 %65, %v19
    %v67 = vpop.permute.xlu0 %66
    %70 = vset.pattern.permute.xlu0 0
    %71 = vperm.xlu0 %70, %v20
    %v72 = vpop.permute.xlu0 %71
    %75 = vset.pattern.permute.xlu0 0
    %76 = vperm.xlu0 %75, %v21
    %v77 = vpop.permute.xlu0 %76
    %80 = vset.pattern.permute.xlu0 0
    %81 = vperm.xlu0 %80, %v22
    %v82 = vpop.permute.xlu0 %81
    %85 = vset.pattern.permute.xlu0 0
    %86 = vperm.xlu0 %85, %v23
    %v87 = vpop.permute.xlu0 %86
    %90 = vset.pattern.permute.xlu0 0
    %91 = vperm.xlu0 %90, %v24
    %v92 = vpop.permute.xlu0 %91
    %95 = vset.pattern.permute.xlu0 0
    %96 = vperm.xlu0 %95, %v25
    %v97 = vpop.permute.xlu0 %96
    %100 = vset.pattern.permute.xlu0 0
    %101 = vperm.xlu0 %100, %v26
    %v102 = vpop.permute.xlu0 %101
    %105 = vset.pattern.permute.xlu0 0
    %106 = vperm.xlu0 %105, %v27
    %v107 = vpop.permute.xlu0 %106
    %110 = vset.pattern.permute.xlu0 0
    %111 = vperm.xlu0 %110, %v28
    %v112 = vpop.permute.xlu0 %111
    %115 = vset.pattern.permute.xlu0 0
    %116 = vperm.xlu0 %115, %v29
    %v117 = vpop.permute.xlu0 %116
    %120 = vset.pattern.permute.xlu0 0
    %121 = vperm.xlu0 %120, %v30
    %v122 = vpop.permute.xlu0 %121
    %125 = vset.pattern.permute.xlu0 0
    %126 = vperm.xlu0 %125, %v31
    %v127 = vpop.permute.xlu0 %126
    %130 = vset.pattern.permute.xlu0 0
    %131 = vperm.xlu0 %130, %v32
    %v132 = vpop.permute.xlu0 %131
    %135 = vset.pattern.permute.xlu0 0
    %136 = vperm.xlu0 %135, %v33
    %v137 = vpop.permute.xlu0 %136
    %140 = vset.pattern.permute.xlu0 0
    %141 = vperm.xlu0 %140, %v34
    %v142 = vpop.permute.xlu0 %141
    %145 = vset.pattern.permute.xlu0 0
    %146 = vperm.xlu0 %145, %v35
    %v147 = vpop.permute.xlu0 %146
    %150 = vset.pattern.permute.xlu0 0
    %151 = vperm.xlu0 %150, %v36
    %v152 = vpop.permute.xlu0 %151
    %155 = vset.pattern.permute.xlu0 0
    %156 = vperm.xlu0 %155, %v37
    %v157 = vpop.permute.xlu0 %156
    %160 = vset.pattern.permute.xlu0 0
    %161 = vperm.xlu0 %160, %v38
    %v162 = vpop.permute.xlu0 %161
    %165 = vset.pattern.permute.xlu0 0
    %166 = vperm.xlu0 %165, %v39
    %v167 = vpop.permute.xlu0 %166
    %170 = vset.pattern.permute.xlu0 0
    %171 = vperm.xlu0 %170, %v40
    %v172 = vpop.permute.xlu0 %171
    %175 = vset.pattern.permute.xlu0 0
    %176 = vperm.xlu0 %175, %v41
    %v177 = vpop.permute.xlu0 %176
    %180 = vset.pattern.permute.xlu0 0
    %181 = vperm.xlu0 %180, %v42
    %v182 = vpop.permute.xlu0 %181
    %185 = vset.pattern.permute.xlu0 0
    %186 = vperm.xlu0 %185, %v43
    %v187 = vpop.permute.xlu0 %186
    %190 = vset.pattern.permute.xlu0 0
    %191 = vperm.xlu0 %190, %v44
    %v192 = vpop.permute.xlu0 %191
    %195 = vset.pattern.permute.xlu0 0
    %196 = vperm.xlu0 %195, %v45
    %v197 = vpop.permute.xlu0 %196
    %200 = vset.pattern.permute.xlu0 0
    %201 = vperm.xlu0 %200, %v46
    %v202 = vpop.permute.xlu0 %201
    %205 = vset.pattern.permute.xlu0 0
    %206 = vperm.xlu0 %205, %v47
    %v207 = vpop.permute.xlu0 %206
    %v209 = vlaneseq
    %v210 = vshrl.u32 %v209, 7
    %v211 = vsub.s32 0, %v210
    %v212 = vrot.slane %v48, %v211
    %v213 = vmul.f32 %v52, %v212
    %v214 = vmul.f32 %v57, %v212
    %v215 = vmul.f32 %v62, %v212
    %v216 = vmul.f32 %v67, %v212
    %v217 = vmul.f32 %v72, %v212
    %v218 = vmul.f32 %v77, %v212
    %v219 = vmul.f32 %v82, %v212
    %v220 = vmul.f32 %v87, %v212
    %v221 = vmul.f32 %v92, %v212
    %v222 = vmul.f32 %v97, %v212
    %v223 = vmul.f32 %v102, %v212
    %v224 = vmul.f32 %v107, %v212
    %v225 = vmul.f32 %v112, %v212
    %v226 = vmul.f32 %v117, %v212
    %v227 = vmul.f32 %v122, %v212
    %v228 = vmul.f32 %v127, %v212
    %v229 = vmul.f32 %v132, %v212
    %v230 = vmul.f32 %v137, %v212
    %v231 = vmul.f32 %v142, %v212
    %v232 = vmul.f32 %v147, %v212
    %v233 = vmul.f32 %v152, %v212
    %v234 = vmul.f32 %v157, %v212
    %v235 = vmul.f32 %v162, %v212
    %v236 = vmul.f32 %v167, %v212
    %v237 = vmul.f32 %v172, %v212
    %v238 = vmul.f32 %v177, %v212
    %v239 = vmul.f32 %v182, %v212
    %v240 = vmul.f32 %v187, %v212
    %v241 = vmul.f32 %v192, %v212
    %v242 = vmul.f32 %v197, %v212
    %v243 = vmul.f32 %v202, %v212
    %v244 = vmul.f32 %v207, %v212
    %v245 = vld [vmem:[%s1 + $0x4] sm:$0x1]
    %v246 = vlaneseq
    %v247 = vshrl.u32 %v246, 7
    %v248 = vsub.s32 0, %v247
    %v249 = vrot.slane %v245, %v248
    %v250 = vadd.f32 %v213, %v249
    %v251 = vadd.f32 %v214, %v249
    %v252 = vadd.f32 %v215, %v249
    %v253 = vadd.f32 %v216, %v249
    %v254 = vadd.f32 %v217, %v249
    %v255 = vadd.f32 %v218, %v249
    %v256 = vadd.f32 %v219, %v249
    %v257 = vadd.f32 %v220, %v249
    %v258 = vadd.f32 %v221, %v249
    %v259 = vadd.f32 %v222, %v249
    %v260 = vadd.f32 %v223, %v249
    %v261 = vadd.f32 %v224, %v249
    %v262 = vadd.f32 %v225, %v249
    %v263 = vadd.f32 %v226, %v249
    %v264 = vadd.f32 %v227, %v249
    %v265 = vadd.f32 %v228, %v249
    %v266 = vadd.f32 %v229, %v249
    %v267 = vadd.f32 %v230, %v249
    %v268 = vadd.f32 %v231, %v249
    %v269 = vadd.f32 %v232, %v249
    %v270 = vadd.f32 %v233, %v249
    %v271 = vadd.f32 %v234, %v249
    %v272 = vadd.f32 %v235, %v249
    %v273 = vadd.f32 %v236, %v249
    %v274 = vadd.f32 %v237, %v249
    %v275 = vadd.f32 %v238, %v249
    %v276 = vadd.f32 %v239, %v249
    %v277 = vadd.f32 %v240, %v249
    %v278 = vadd.f32 %v241, %v249
    %v279 = vadd.f32 %v242, %v249
    %v280 = vadd.f32 %v243, %v249
    %v281 = vadd.f32 %v244, %v249
    %v282 = vld [vmem:[%s1 + $0x1] sm:$0x1]
    %283 = vset.pattern.permute.xlu0 1
    %284 = vperm.xlu0 %283, %v16
    %v285 = vpop.permute.xlu0 %284
    %287 = vset.pattern.permute.xlu0 1
    %288 = vperm.xlu0 %287, %v17
    %v289 = vpop.permute.xlu0 %288
    %291 = vset.pattern.permute.xlu0 1
    %292 = vperm.xlu0 %291, %v18
    %v293 = vpop.permute.xlu0 %292
    %295 = vset.pattern.permute.xlu0 1
    %296 = vperm.xlu0 %295, %v19
    %v297 = vpop.permute.xlu0 %296
    %299 = vset.pattern.permute.xlu0 1
    %300 = vperm.xlu0 %299, %v20
    %v301 = vpop.permute.xlu0 %300
    %303 = vset.pattern.permute.xlu0 1
    %304 = vperm.xlu0 %303, %v21
    %v305 = vpop.permute.xlu0 %304
    %307 = vset.pattern.permute.xlu0 1
    %308 = vperm.xlu0 %307, %v22
    %v309 = vpop.permute.xlu0 %308
    %311 = vset.pattern.permute.xlu0 1
    %312 = vperm.xlu0 %311, %v23
    %v313 = vpop.permute.xlu0 %312
    %315 = vset.pattern.permute.xlu0 1
    %316 = vperm.xlu0 %315, %v24
    %v317 = vpop.permute.xlu0 %316
    %319 = vset.pattern.permute.xlu0 1
    %320 = vperm.xlu0 %319, %v25
    %v321 = vpop.permute.xlu0 %320
    %323 = vset.pattern.permute.xlu0 1
    %324 = vperm.xlu0 %323, %v26
    %v325 = vpop.permute.xlu0 %324
    %327 = vset.pattern.permute.xlu0 1
    %328 = vperm.xlu0 %327, %v27
    %v329 = vpop.permute.xlu0 %328
    %331 = vset.pattern.permute.xlu0 1
    %332 = vperm.xlu0 %331, %v28
    %v333 = vpop.permute.xlu0 %332
    %335 = vset.pattern.permute.xlu0 1
    %336 = vperm.xlu0 %335, %v29
    %v337 = vpop.permute.xlu0 %336
    %339 = vset.pattern.permute.xlu0 1
    %340 = vperm.xlu0 %339, %v30
    %v341 = vpop.permute.xlu0 %340
    %343 = vset.pattern.permute.xlu0 1
    %344 = vperm.xlu0 %343, %v31
    %v345 = vpop.permute.xlu0 %344
    %347 = vset.pattern.permute.xlu0 1
    %348 = vperm.xlu0 %347, %v32
    %v349 = vpop.permute.xlu0 %348
    %351 = vset.pattern.permute.xlu0 1
    %352 = vperm.xlu0 %351, %v33
    %v353 = vpop.permute.xlu0 %352
    %355 = vset.pattern.permute.xlu0 1
    %356 = vperm.xlu0 %355, %v34
    %v357 = vpop.permute.xlu0 %356
    %359 = vset.pattern.permute.xlu0 1
    %360 = vperm.xlu0 %359, %v35
    %v361 = vpop.permute.xlu0 %360
    %363 = vset.pattern.permute.xlu0 1
    %364 = vperm.xlu0 %363, %v36
    %v365 = vpop.permute.xlu0 %364
    %367 = vset.pattern.permute.xlu0 1
    %368 = vperm.xlu0 %367, %v37
    %v369 = vpop.permute.xlu0 %368
    %371 = vset.pattern.permute.xlu0 1
    %372 = vperm.xlu0 %371, %v38
    %v373 = vpop.permute.xlu0 %372
    %375 = vset.pattern.permute.xlu0 1
    %376 = vperm.xlu0 %375, %v39
    %v377 = vpop.permute.xlu0 %376
    %379 = vset.pattern.permute.xlu0 1
    %380 = vperm.xlu0 %379, %v40
    %v381 = vpop.permute.xlu0 %380
    %383 = vset.pattern.permute.xlu0 1
    %384 = vperm.xlu0 %383, %v41
    %v385 = vpop.permute.xlu0 %384
    %387 = vset.pattern.permute.xlu0 1
    %388 = vperm.xlu0 %387, %v42
    %v389 = vpop.permute.xlu0 %388
    %391 = vset.pattern.permute.xlu0 1
    %392 = vperm.xlu0 %391, %v43
    %v393 = vpop.permute.xlu0 %392
    %395 = vset.pattern.permute.xlu0 1
    %396 = vperm.xlu0 %395, %v44
    %v397 = vpop.permute.xlu0 %396
    %399 = vset.pattern.permute.xlu0 1
    %400 = vperm.xlu0 %399, %v45
    %v401 = vpop.permute.xlu0 %400
    %403 = vset.pattern.permute.xlu0 1
    %404 = vperm.xlu0 %403, %v46
    %v405 = vpop.permute.xlu0 %404
    %407 = vset.pattern.permute.xlu0 1
    %408 = vperm.xlu0 %407, %v47
    %v409 = vpop.permute.xlu0 %408
    %v411 = vlaneseq
    %v412 = vshrl.u32 %v411, 7
    %v413 = vsub.s32 0, %v412
    %v414 = vrot.slane %v282, %v413
    %v415 = vmul.f32 %v285, %v414
    %v416 = vmul.f32 %v289, %v414
    %v417 = vmul.f32 %v293, %v414
    %v418 = vmul.f32 %v297, %v414
    %v419 = vmul.f32 %v301, %v414
    %v420 = vmul.f32 %v305, %v414
    %v421 = vmul.f32 %v309, %v414
    %v422 = vmul.f32 %v313, %v414
    %v423 = vmul.f32 %v317, %v414
    %v424 = vmul.f32 %v321, %v414
    %v425 = vmul.f32 %v325, %v414
    %v426 = vmul.f32 %v329, %v414
    %v427 = vmul.f32 %v333, %v414
    %v428 = vmul.f32 %v337, %v414
    %v429 = vmul.f32 %v341, %v414
    %v430 = vmul.f32 %v345, %v414
    %v431 = vmul.f32 %v349, %v414
    %v432 = vmul.f32 %v353, %v414
    %v433 = vmul.f32 %v357, %v414
    %v434 = vmul.f32 %v361, %v414
    %v435 = vmul.f32 %v365, %v414
    %v436 = vmul.f32 %v369, %v414
    %v437 = vmul.f32 %v373, %v414
    %v438 = vmul.f32 %v377, %v414
    %v439 = vmul.f32 %v381, %v414
    %v440 = vmul.f32 %v385, %v414
    %v441 = vmul.f32 %v389, %v414
    %v442 = vmul.f32 %v393, %v414
    %v443 = vmul.f32 %v397, %v414
    %v444 = vmul.f32 %v401, %v414
    %v445 = vmul.f32 %v405, %v414
    %v446 = vmul.f32 %v409, %v414
    %v447 = vadd.f32 %v250, %v415
    %v448 = vadd.f32 %v251, %v416
    %v449 = vadd.f32 %v252, %v417
    %v450 = vadd.f32 %v253, %v418
    %v451 = vadd.f32 %v254, %v419
    %v452 = vadd.f32 %v255, %v420
    %v453 = vadd.f32 %v256, %v421
    %v454 = vadd.f32 %v257, %v422
    %v455 = vadd.f32 %v258, %v423
    %v456 = vadd.f32 %v259, %v424
    %v457 = vadd.f32 %v260, %v425
    %v458 = vadd.f32 %v261, %v426
    %v459 = vadd.f32 %v262, %v427
    %v460 = vadd.f32 %v263, %v428
    %v461 = vadd.f32 %v264, %v429
    %v462 = vadd.f32 %v265, %v430
    %v463 = vadd.f32 %v266, %v431
    %v464 = vadd.f32 %v267, %v432
    %v465 = vadd.f32 %v268, %v433
    %v466 = vadd.f32 %v269, %v434
    %v467 = vadd.f32 %v270, %v435
    %v468 = vadd.f32 %v271, %v436
    %v469 = vadd.f32 %v272, %v437
    %v470 = vadd.f32 %v273, %v438
    %v471 = vadd.f32 %v274, %v439
    %v472 = vadd.f32 %v275, %v440
    %v473 = vadd.f32 %v276, %v441
    %v474 = vadd.f32 %v277, %v442
    %v475 = vadd.f32 %v278, %v443
    %v476 = vadd.f32 %v279, %v444
    %v477 = vadd.f32 %v280, %v445
    %v478 = vadd.f32 %v281, %v446
    %v479 = vld [vmem:[%s1 + $0x2] sm:$0x1]
    %480 = vset.pattern.permute.xlu0 2
    %481 = vperm.xlu0 %480, %v16
    %v482 = vpop.permute.xlu0 %481
    %484 = vset.pattern.permute.xlu0 2
    %485 = vperm.xlu0 %484, %v17
    %v486 = vpop.permute.xlu0 %485
    %488 = vset.pattern.permute.xlu0 2
    %489 = vperm.xlu0 %488, %v18
    %v490 = vpop.permute.xlu0 %489
    %492 = vset.pattern.permute.xlu0 2
    %493 = vperm.xlu0 %492, %v19
    %v494 = vpop.permute.xlu0 %493
    %496 = vset.pattern.permute.xlu0 2
    %497 = vperm.xlu0 %496, %v20
    %v498 = vpop.permute.xlu0 %497
    %500 = vset.pattern.permute.xlu0 2
    %501 = vperm.xlu0 %500, %v21
    %v502 = vpop.permute.xlu0 %501
    %504 = vset.pattern.permute.xlu0 2
    %505 = vperm.xlu0 %504, %v22
    %v506 = vpop.permute.xlu0 %505
    %508 = vset.pattern.permute.xlu0 2
    %509 = vperm.xlu0 %508, %v23
    %v510 = vpop.permute.xlu0 %509
    %512 = vset.pattern.permute.xlu0 2
    %513 = vperm.xlu0 %512, %v24
    %v514 = vpop.permute.xlu0 %513
    %516 = vset.pattern.permute.xlu0 2
    %517 = vperm.xlu0 %516, %v25
    %v518 = vpop.permute.xlu0 %517
    %520 = vset.pattern.permute.xlu0 2
    %521 = vperm.xlu0 %520, %v26
    %v522 = vpop.permute.xlu0 %521
    %524 = vset.pattern.permute.xlu0 2
    %525 = vperm.xlu0 %524, %v27
    %v526 = vpop.permute.xlu0 %525
    %528 = vset.pattern.permute.xlu0 2
    %529 = vperm.xlu0 %528, %v28
    %v530 = vpop.permute.xlu0 %529
    %532 = vset.pattern.permute.xlu0 2
    %533 = vperm.xlu0 %532, %v29
    %v534 = vpop.permute.xlu0 %533
    %536 = vset.pattern.permute.xlu0 2
    %537 = vperm.xlu0 %536, %v30
    %v538 = vpop.permute.xlu0 %537
    %540 = vset.pattern.permute.xlu0 2
    %541 = vperm.xlu0 %540, %v31
    %v542 = vpop.permute.xlu0 %541
    %544 = vset.pattern.permute.xlu0 2
    %545 = vperm.xlu0 %544, %v32
    %v546 = vpop.permute.xlu0 %545
    %548 = vset.pattern.permute.xlu0 2
    %549 = vperm.xlu0 %548, %v33
    %v550 = vpop.permute.xlu0 %549
    %552 = vset.pattern.permute.xlu0 2
    %553 = vperm.xlu0 %552, %v34
    %v554 = vpop.permute.xlu0 %553
    %556 = vset.pattern.permute.xlu0 2
    %557 = vperm.xlu0 %556, %v35
    %v558 = vpop.permute.xlu0 %557
    %560 = vset.pattern.permute.xlu0 2
    %561 = vperm.xlu0 %560, %v36
    %v562 = vpop.permute.xlu0 %561
    %564 = vset.pattern.permute.xlu0 2
    %565 = vperm.xlu0 %564, %v37
    %v566 = vpop.permute.xlu0 %565
    %568 = vset.pattern.permute.xlu0 2
    %569 = vperm.xlu0 %568, %v38
    %v570 = vpop.permute.xlu0 %569
    %572 = vset.pattern.permute.xlu0 2
    %573 = vperm.xlu0 %572, %v39
    %v574 = vpop.permute.xlu0 %573
    %576 = vset.pattern.permute.xlu0 2
    %577 = vperm.xlu0 %576, %v40
    %v578 = vpop.permute.xlu0 %577
    %580 = vset.pattern.permute.xlu0 2
    %581 = vperm.xlu0 %580, %v41
    %v582 = vpop.permute.xlu0 %581
    %584 = vset.pattern.permute.xlu0 2
    %585 = vperm.xlu0 %584, %v42
    %v586 = vpop.permute.xlu0 %585
    %588 = vset.pattern.permute.xlu0 2
    %589 = vperm.xlu0 %588, %v43
    %v590 = vpop.permute.xlu0 %589
    %592 = vset.pattern.permute.xlu0 2
    %593 = vperm.xlu0 %592, %v44
    %v594 = vpop.permute.xlu0 %593
    %596 = vset.pattern.permute.xlu0 2
    %597 = vperm.xlu0 %596, %v45
    %v598 = vpop.permute.xlu0 %597
    %600 = vset.pattern.permute.xlu0 2
    %601 = vperm.xlu0 %600, %v46
    %v602 = vpop.permute.xlu0 %601
    %604 = vset.pattern.permute.xlu0 2
    %605 = vperm.xlu0 %604, %v47
    %v606 = vpop.permute.xlu0 %605
    %v608 = vlaneseq
    %v609 = vshrl.u32 %v608, 7
    %v610 = vsub.s32 0, %v609
    %v611 = vrot.slane %v479, %v610
    %v612 = vmul.f32 %v482, %v611
    %v613 = vmul.f32 %v486, %v611
    %v614 = vmul.f32 %v490, %v611
    %v615 = vmul.f32 %v494, %v611
    %v616 = vmul.f32 %v498, %v611
    %v617 = vmul.f32 %v502, %v611
    %v618 = vmul.f32 %v506, %v611
    %v619 = vmul.f32 %v510, %v611
    %v620 = vmul.f32 %v514, %v611
    %v621 = vmul.f32 %v518, %v611
    %v622 = vmul.f32 %v522, %v611
    %v623 = vmul.f32 %v526, %v611
    %v624 = vmul.f32 %v530, %v611
    %v625 = vmul.f32 %v534, %v611
    %v626 = vmul.f32 %v538, %v611
    %v627 = vmul.f32 %v542, %v611
    %v628 = vmul.f32 %v546, %v611
    %v629 = vmul.f32 %v550, %v611
    %v630 = vmul.f32 %v554, %v611
    %v631 = vmul.f32 %v558, %v611
    %v632 = vmul.f32 %v562, %v611
    %v633 = vmul.f32 %v566, %v611
    %v634 = vmul.f32 %v570, %v611
    %v635 = vmul.f32 %v574, %v611
    %v636 = vmul.f32 %v578, %v611
    %v637 = vmul.f32 %v582, %v611
    %v638 = vmul.f32 %v586, %v611
    %v639 = vmul.f32 %v590, %v611
    %v640 = vmul.f32 %v594, %v611
    %v641 = vmul.f32 %v598, %v611
    %v642 = vmul.f32 %v602, %v611
    %v643 = vmul.f32 %v606, %v611
    %v644 = vadd.f32 %v447, %v612
    %v645 = vadd.f32 %v448, %v613
    %v646 = vadd.f32 %v449, %v614
    %v647 = vadd.f32 %v450, %v615
    %v648 = vadd.f32 %v451, %v616
    %v649 = vadd.f32 %v452, %v617
    %v650 = vadd.f32 %v453, %v618
    %v651 = vadd.f32 %v454, %v619
    %v652 = vadd.f32 %v455, %v620
    %v653 = vadd.f32 %v456, %v621
    %v654 = vadd.f32 %v457, %v622
    %v655 = vadd.f32 %v458, %v623
    %v656 = vadd.f32 %v459, %v624
    %v657 = vadd.f32 %v460, %v625
    %v658 = vadd.f32 %v461, %v626
    %v659 = vadd.f32 %v462, %v627
    %v660 = vadd.f32 %v463, %v628
    %v661 = vadd.f32 %v464, %v629
    %v662 = vadd.f32 %v465, %v630
    %v663 = vadd.f32 %v466, %v631
    %v664 = vadd.f32 %v467, %v632
    %v665 = vadd.f32 %v468, %v633
    %v666 = vadd.f32 %v469, %v634
    %v667 = vadd.f32 %v470, %v635
    %v668 = vadd.f32 %v471, %v636
    %v669 = vadd.f32 %v472, %v637
    %v670 = vadd.f32 %v473, %v638
    %v671 = vadd.f32 %v474, %v639
    %v672 = vadd.f32 %v475, %v640
    %v673 = vadd.f32 %v476, %v641
    %v674 = vadd.f32 %v477, %v642
    %v675 = vadd.f32 %v478, %v643
    %v676 = vld [vmem:[%s1 + $0x3] sm:$0x1]
    %677 = vset.pattern.permute.xlu0 3
    %678 = vperm.xlu0 %677, %v16
    %v679 = vpop.permute.xlu0 %678
    %681 = vset.pattern.permute.xlu0 3
    %682 = vperm.xlu0 %681, %v17
    %v683 = vpop.permute.xlu0 %682
    %685 = vset.pattern.permute.xlu0 3
    %686 = vperm.xlu0 %685, %v18
    %v687 = vpop.permute.xlu0 %686
    %689 = vset.pattern.permute.xlu0 3
    %690 = vperm.xlu0 %689, %v19
    %v691 = vpop.permute.xlu0 %690
    %693 = vset.pattern.permute.xlu0 3
    %694 = vperm.xlu0 %693, %v20
    %v695 = vpop.permute.xlu0 %694
    %697 = vset.pattern.permute.xlu0 3
    %698 = vperm.xlu0 %697, %v21
    %v699 = vpop.permute.xlu0 %698
    %701 = vset.pattern.permute.xlu0 3
    %702 = vperm.xlu0 %701, %v22
    %v703 = vpop.permute.xlu0 %702
    %705 = vset.pattern.permute.xlu0 3
    %706 = vperm.xlu0 %705, %v23
    %v707 = vpop.permute.xlu0 %706
    %709 = vset.pattern.permute.xlu0 3
    %710 = vperm.xlu0 %709, %v24
    %v711 = vpop.permute.xlu0 %710
    %713 = vset.pattern.permute.xlu0 3
    %714 = vperm.xlu0 %713, %v25
    %v715 = vpop.permute.xlu0 %714
    %717 = vset.pattern.permute.xlu0 3
    %718 = vperm.xlu0 %717, %v26
    %v719 = vpop.permute.xlu0 %718
    %721 = vset.pattern.permute.xlu0 3
    %722 = vperm.xlu0 %721, %v27
    %v723 = vpop.permute.xlu0 %722
    %725 = vset.pattern.permute.xlu0 3
    %726 = vperm.xlu0 %725, %v28
    %v727 = vpop.permute.xlu0 %726
    %729 = vset.pattern.permute.xlu0 3
    %730 = vperm.xlu0 %729, %v29
    %v731 = vpop.permute.xlu0 %730
    %733 = vset.pattern.permute.xlu0 3
    %734 = vperm.xlu0 %733, %v30
    %v735 = vpop.permute.xlu0 %734
    %737 = vset.pattern.permute.xlu0 3
    %738 = vperm.xlu0 %737, %v31
    %v739 = vpop.permute.xlu0 %738
    %741 = vset.pattern.permute.xlu0 3
    %742 = vperm.xlu0 %741, %v32
    %v743 = vpop.permute.xlu0 %742
    %745 = vset.pattern.permute.xlu0 3
    %746 = vperm.xlu0 %745, %v33
    %v747 = vpop.permute.xlu0 %746
    %749 = vset.pattern.permute.xlu0 3
    %750 = vperm.xlu0 %749, %v34
    %v751 = vpop.permute.xlu0 %750
    %753 = vset.pattern.permute.xlu0 3
    %754 = vperm.xlu0 %753, %v35
    %v755 = vpop.permute.xlu0 %754
    %757 = vset.pattern.permute.xlu0 3
    %758 = vperm.xlu0 %757, %v36
    %v759 = vpop.permute.xlu0 %758
    %761 = vset.pattern.permute.xlu0 3
    %762 = vperm.xlu0 %761, %v37
    %v763 = vpop.permute.xlu0 %762
    %765 = vset.pattern.permute.xlu0 3
    %766 = vperm.xlu0 %765, %v38
    %v767 = vpop.permute.xlu0 %766
    %769 = vset.pattern.permute.xlu0 3
    %770 = vperm.xlu0 %769, %v39
    %v771 = vpop.permute.xlu0 %770
    %773 = vset.pattern.permute.xlu0 3
    %774 = vperm.xlu0 %773, %v40
    %v775 = vpop.permute.xlu0 %774
    %777 = vset.pattern.permute.xlu0 3
    %778 = vperm.xlu0 %777, %v41
    %v779 = vpop.permute.xlu0 %778
    %781 = vset.pattern.permute.xlu0 3
    %782 = vperm.xlu0 %781, %v42
    %v783 = vpop.permute.xlu0 %782
    %785 = vset.pattern.permute.xlu0 3
    %786 = vperm.xlu0 %785, %v43
    %v787 = vpop.permute.xlu0 %786
    %789 = vset.pattern.permute.xlu0 3
    %790 = vperm.xlu0 %789, %v44
    %v791 = vpop.permute.xlu0 %790
    %793 = vset.pattern.permute.xlu0 3
    %794 = vperm.xlu0 %793, %v45
    %v795 = vpop.permute.xlu0 %794
    %797 = vset.pattern.permute.xlu0 3
    %798 = vperm.xlu0 %797, %v46
    %v799 = vpop.permute.xlu0 %798
    %801 = vset.pattern.permute.xlu0 3
    %802 = vperm.xlu0 %801, %v47
    %v803 = vpop.permute.xlu0 %802
    %v805 = vlaneseq
    %v806 = vshrl.u32 %v805, 7
    %v807 = vsub.s32 0, %v806
    %v808 = vrot.slane %v676, %v807
    %v809 = vmul.f32 %v679, %v808
    %v810 = vmul.f32 %v683, %v808
    %v811 = vmul.f32 %v687, %v808
    %v812 = vmul.f32 %v691, %v808
    %v813 = vmul.f32 %v695, %v808
    %v814 = vmul.f32 %v699, %v808
    %v815 = vmul.f32 %v703, %v808
    %v816 = vmul.f32 %v707, %v808
    %v817 = vmul.f32 %v711, %v808
    %v818 = vmul.f32 %v715, %v808
    %v819 = vmul.f32 %v719, %v808
    %v820 = vmul.f32 %v723, %v808
    %v821 = vmul.f32 %v727, %v808
    %v822 = vmul.f32 %v731, %v808
    %v823 = vmul.f32 %v735, %v808
    %v824 = vmul.f32 %v739, %v808
    %v825 = vmul.f32 %v743, %v808
    %v826 = vmul.f32 %v747, %v808
    %v827 = vmul.f32 %v751, %v808
    %v828 = vmul.f32 %v755, %v808
    %v829 = vmul.f32 %v759, %v808
    %v830 = vmul.f32 %v763, %v808
    %v831 = vmul.f32 %v767, %v808
    %v832 = vmul.f32 %v771, %v808
    %v833 = vmul.f32 %v775, %v808
    %v834 = vmul.f32 %v779, %v808
    %v835 = vmul.f32 %v783, %v808
    %v836 = vmul.f32 %v787, %v808
    %v837 = vmul.f32 %v791, %v808
    %v838 = vmul.f32 %v795, %v808
    %v839 = vmul.f32 %v799, %v808
    %v840 = vmul.f32 %v803, %v808
    %v841 = vadd.f32 %v644, %v809
    %v842 = vadd.f32 %v645, %v810
    %v843 = vadd.f32 %v646, %v811
    %v844 = vadd.f32 %v647, %v812
    %v845 = vadd.f32 %v648, %v813
    %v846 = vadd.f32 %v649, %v814
    %v847 = vadd.f32 %v650, %v815
    %v848 = vadd.f32 %v651, %v816
    %v849 = vadd.f32 %v652, %v817
    %v850 = vadd.f32 %v653, %v818
    %v851 = vadd.f32 %v654, %v819
    %v852 = vadd.f32 %v655, %v820
    %v853 = vadd.f32 %v656, %v821
    %v854 = vadd.f32 %v657, %v822
    %v855 = vadd.f32 %v658, %v823
    %v856 = vadd.f32 %v659, %v824
    %v857 = vadd.f32 %v660, %v825
    %v858 = vadd.f32 %v661, %v826
    %v859 = vadd.f32 %v662, %v827
    %v860 = vadd.f32 %v663, %v828
    %v861 = vadd.f32 %v664, %v829
    %v862 = vadd.f32 %v665, %v830
    %v863 = vadd.f32 %v666, %v831
    %v864 = vadd.f32 %v667, %v832
    %v865 = vadd.f32 %v668, %v833
    %v866 = vadd.f32 %v669, %v834
    %v867 = vadd.f32 %v670, %v835
    %v868 = vadd.f32 %v671, %v836
    %v869 = vadd.f32 %v672, %v837
    %v870 = vadd.f32 %v673, %v838
    %v871 = vadd.f32 %v674, %v839
    %v872 = vadd.f32 %v675, %v840
    %v873 = vmax.f32 %v841, 0.0
    %v874 = vmax.f32 %v842, 0.0
    %v875 = vmax.f32 %v843, 0.0
    %v876 = vmax.f32 %v844, 0.0
    %v877 = vmax.f32 %v845, 0.0
    %v878 = vmax.f32 %v846, 0.0
    %v879 = vmax.f32 %v847, 0.0
    %v880 = vmax.f32 %v848, 0.0
    %v881 = vmax.f32 %v849, 0.0
    %v882 = vmax.f32 %v850, 0.0
    %v883 = vmax.f32 %v851, 0.0
    %v884 = vmax.f32 %v852, 0.0
    %v885 = vmax.f32 %v853, 0.0
    %v886 = vmax.f32 %v854, 0.0
    %v887 = vmax.f32 %v855, 0.0
    %v888 = vmax.f32 %v856, 0.0
    %v889 = vmax.f32 %v857, 0.0
    %v890 = vmax.f32 %v858, 0.0
    %v891 = vmax.f32 %v859, 0.0
    %v892 = vmax.f32 %v860, 0.0
    %v893 = vmax.f32 %v861, 0.0
    %v894 = vmax.f32 %v862, 0.0
    %v895 = vmax.f32 %v863, 0.0
    %v896 = vmax.f32 %v864, 0.0
    %v897 = vmax.f32 %v865, 0.0
    %v898 = vmax.f32 %v866, 0.0
    %v899 = vmax.f32 %v867, 0.0
    %v900 = vmax.f32 %v868, 0.0
    %v901 = vmax.f32 %v869, 0.0
    %v902 = vmax.f32 %v870, 0.0
    %v903 = vmax.f32 %v871, 0.0
    %v904 = vmax.f32 %v872, 0.0
    %v905 = vpack.c.bf16 %v874, %v873
    %v906 = vpack.c.bf16 %v876, %v875
    %v907 = vpack.c.bf16 %v878, %v877
    %v908 = vpack.c.bf16 %v880, %v879
    %v909 = vpack.c.bf16 %v882, %v881
    %v910 = vpack.c.bf16 %v884, %v883
    %v911 = vpack.c.bf16 %v886, %v885
    %v912 = vpack.c.bf16 %v888, %v887
    %v913 = vpack.c.bf16 %v890, %v889
    %v914 = vpack.c.bf16 %v892, %v891
    %v915 = vpack.c.bf16 %v894, %v893
    %v916 = vpack.c.bf16 %v896, %v895
    %v917 = vpack.c.bf16 %v898, %v897
    %v918 = vpack.c.bf16 %v900, %v899
    %v919 = vpack.c.bf16 %v902, %v901
    %v920 = vpack.c.bf16 %v904, %v903
    %v921 = vld [vmem:[%s2] sm:$0xf]
    %v922 = vld [vmem:[%s2 + $0x8] sm:$0xf]
    %v923 = vld [vmem:[%s2 + $0x10] sm:$0xf]
    %v924 = vld [vmem:[%s2 + $0x18] sm:$0xf]
    %v925 = vld [vmem:[%s2 + $0x20] sm:$0xf]
    %v926 = vld [vmem:[%s2 + $0x28] sm:$0xf]
    %v927 = vld [vmem:[%s2 + $0x30] sm:$0xf]
    %v928 = vld [vmem:[%s2 + $0x38] sm:$0xf]
    %v929 = vld [vmem:[%s2 + $0x40] sm:$0xf]
    %v930 = vld [vmem:[%s2 + $0x48] sm:$0xf]
    %v931 = vld [vmem:[%s2 + $0x50] sm:$0xf]
    %v932 = vld [vmem:[%s2 + $0x58] sm:$0xf]
    %v933 = vld [vmem:[%s2 + $0x60] sm:$0xf]
    %v934 = vld [vmem:[%s2 + $0x68] sm:$0xf]
    %v935 = vld [vmem:[%s2 + $0x70] sm:$0xf]
    %v936 = vld [vmem:[%s2 + $0x78] sm:$0xf]
    %v937 = vld [vmem:[%s1 + $0x5] sm:$0x1]
    %v938 = vlaneseq
    %v939 = vshrl.u32 %v938, 7
    %v940 = vsub.s32 0, %v939
    %v941 = vrot.slane %v937, %v940
    %v958 = vunpack.c.l.b16 %v921
    %v959 = vunpack.c.l.b16 %v922
    %v960 = vunpack.c.l.b16 %v923
    %v961 = vunpack.c.l.b16 %v924
    %v962 = vunpack.c.l.b16 %v925
    %v963 = vunpack.c.l.b16 %v926
    %v964 = vunpack.c.l.b16 %v927
    %v965 = vunpack.c.l.b16 %v928
    %v966 = vunpack.c.l.b16 %v929
    %v967 = vunpack.c.l.b16 %v930
    %v968 = vunpack.c.l.b16 %v931
    %v969 = vunpack.c.l.b16 %v932
    %v970 = vunpack.c.l.b16 %v933
    %v971 = vunpack.c.l.b16 %v934
    %v972 = vunpack.c.l.b16 %v935
    %v973 = vunpack.c.l.b16 %v936
    %v974 = vpack.c.b16 %v959, %v958
    %v975 = vpack.c.b16 %v961, %v960
    %v976 = vpack.c.b16 %v963, %v962
    %v977 = vpack.c.b16 %v965, %v964
    %v978 = vpack.c.b16 %v967, %v966
    %v979 = vpack.c.b16 %v969, %v968
    %v980 = vpack.c.b16 %v971, %v970
    %v981 = vpack.c.b16 %v973, %v972
    %990 = vmatprep.subr.bf16.mxu0 0
    %991 = vmatpush1.bf16.msra.mxu0 %v974
    %992 = vmatprep.subr.bf16.mxu0 0
    %993 = vmatpush1.bf16.msra.mxu0 %v975
    %994 = vmatprep.subr.bf16.mxu0 0
    %995 = vmatpush1.bf16.msra.mxu0 %v976
    %996 = vmatprep.subr.bf16.mxu0 0
    %997 = vmatpush1.bf16.msra.mxu0 %v977
    %998 = vmatprep.subr.bf16.mxu0 0
    %999 = vmatpush1.bf16.msra.mxu0 %v978
    %1000 = vmatprep.subr.bf16.mxu0 0
    %1001 = vmatpush1.bf16.msra.mxu0 %v979
    %1002 = vmatprep.subr.bf16.mxu0 0
    %1003 = vmatpush1.bf16.msra.mxu0 %v980
    %1004 = vmatprep.subr.bf16.mxu0 0
    %1005 = vmatpush1.bf16.msra.mxu0 %v981
    %1006 = vmatprep.subr.bf16.mxu0 0
    %1007 = vmatpush1.bf16.msra.mxu0 0
    %1008 = vmatprep.subr.bf16.mxu0 0
    %1009 = vmatpush1.bf16.msra.mxu0 0
    %1010 = vmatprep.subr.bf16.mxu0 0
    %1011 = vmatpush1.bf16.msra.mxu0 0
    %1012 = vmatprep.subr.bf16.mxu0 0
    %1013 = vmatpush1.bf16.msra.mxu0 0
    %1014 = vmatprep.subr.bf16.mxu0 0
    %1015 = vmatpush1.bf16.msra.mxu0 0
    %1016 = vmatprep.subr.bf16.mxu0 0
    %1017 = vmatpush1.bf16.msra.mxu0 0
    %1018 = vmatprep.subr.bf16.mxu0 0
    %1019 = vmatpush1.bf16.msra.mxu0 0
    %1020 = vmatprep.subr.bf16.mxu0 0
    %1021 = vmatpush1.bf16.msra.mxu0 0
    %1022 = vmatprep.mubr.bf16.mxu0 0
    %1023 = vmatmul.mubr.bf16.gmra.mrb[0].mxu0 %v905
    %v1024 = vpop.f32.mrb[0].mxu0
    %v1025 = vadd.f32 %v941, %v1024
    %v1026 = vpop.f32.mrb[0].mxu0
    %v1027 = vpop.f32.mrb[0].mxu0
    %v1028 = vadd.f32 %v941, %v1027
    %v1029 = vpop.f32.mrb[0].mxu0
    %1030 = vmatprep.mubr.bf16.mxu0 0
    %1031 = vmatmul.mubr.bf16.gmra.mrb[0].mxu0 %v906
    %v1032 = vpop.f32.mrb[0].mxu0
    %v1033 = vadd.f32 %v941, %v1032
    %v1034 = vpop.f32.mrb[0].mxu0
    %v1035 = vpop.f32.mrb[0].mxu0
    %v1036 = vadd.f32 %v941, %v1035
    %v1037 = vpop.f32.mrb[0].mxu0
    %1038 = vmatprep.mubr.bf16.mxu0 0
    %1039 = vmatmul.mubr.bf16.gmra.mrb[0].mxu0 %v907
    %v1040 = vpop.f32.mrb[0].mxu0
    %v1041 = vadd.f32 %v941, %v1040
    %v1042 = vpop.f32.mrb[0].mxu0
    %v1043 = vpop.f32.mrb[0].mxu0
    %v1044 = vadd.f32 %v941, %v1043
    %v1045 = vpop.f32.mrb[0].mxu0
    %1046 = vmatprep.mubr.bf16.mxu0 0
    %1047 = vmatmul.mubr.bf16.gmra.mrb[0].mxu0 %v908
    %v1048 = vpop.f32.mrb[0].mxu0
    %v1049 = vadd.f32 %v941, %v1048
    %v1050 = vpop.f32.mrb[0].mxu0
    %v1051 = vpop.f32.mrb[0].mxu0
    %v1052 = vadd.f32 %v941, %v1051
    %v1053 = vpop.f32.mrb[0].mxu0
    %1054 = vmatprep.mubr.bf16.mxu0 0
    %1055 = vmatmul.mubr.bf16.gmra.mrb[0].mxu0 %v909
    %v1056 = vpop.f32.mrb[0].mxu0
    %v1057 = vadd.f32 %v941, %v1056
    %v1058 = vpop.f32.mrb[0].mxu0
    %v1059 = vpop.f32.mrb[0].mxu0
    %v1060 = vadd.f32 %v941, %v1059
    %v1061 = vpop.f32.mrb[0].mxu0
    %1062 = vmatprep.mubr.bf16.mxu0 0
    %1063 = vmatmul.mubr.bf16.gmra.mrb[0].mxu0 %v910
    %v1064 = vpop.f32.mrb[0].mxu0
    %v1065 = vadd.f32 %v941, %v1064
    %v1066 = vpop.f32.mrb[0].mxu0
    %v1067 = vpop.f32.mrb[0].mxu0
    %v1068 = vadd.f32 %v941, %v1067
    %v1069 = vpop.f32.mrb[0].mxu0
    %1070 = vmatprep.mubr.bf16.mxu0 0
    %1071 = vmatmul.mubr.bf16.gmra.mrb[0].mxu0 %v911
    %v1072 = vpop.f32.mrb[0].mxu0
    %v1073 = vadd.f32 %v941, %v1072
    %v1074 = vpop.f32.mrb[0].mxu0
    %v1075 = vpop.f32.mrb[0].mxu0
    %v1076 = vadd.f32 %v941, %v1075
    %v1077 = vpop.f32.mrb[0].mxu0
    %1078 = vmatprep.mubr.bf16.mxu0 0
    %1079 = vmatmul.mubr.bf16.gmra.mrb[0].mxu0 %v912
    %v1080 = vpop.f32.mrb[0].mxu0
    %v1081 = vadd.f32 %v941, %v1080
    %v1082 = vpop.f32.mrb[0].mxu0
    %v1083 = vpop.f32.mrb[0].mxu0
    %v1084 = vadd.f32 %v941, %v1083
    %v1085 = vpop.f32.mrb[0].mxu0
    %1086 = vmatprep.mubr.bf16.mxu0 0
    %1087 = vmatmul.mubr.bf16.gmra.mrb[0].mxu0 %v913
    %v1088 = vpop.f32.mrb[0].mxu0
    %v1089 = vadd.f32 %v941, %v1088
    %v1090 = vpop.f32.mrb[0].mxu0
    %v1091 = vpop.f32.mrb[0].mxu0
    %v1092 = vadd.f32 %v941, %v1091
    %v1093 = vpop.f32.mrb[0].mxu0
    %1094 = vmatprep.mubr.bf16.mxu0 0
    %1095 = vmatmul.mubr.bf16.gmra.mrb[0].mxu0 %v914
    %v1096 = vpop.f32.mrb[0].mxu0
    %v1097 = vadd.f32 %v941, %v1096
    %v1098 = vpop.f32.mrb[0].mxu0
    %v1099 = vpop.f32.mrb[0].mxu0
    %v1100 = vadd.f32 %v941, %v1099
    %v1101 = vpop.f32.mrb[0].mxu0
    %1102 = vmatprep.mubr.bf16.mxu0 0
    %1103 = vmatmul.mubr.bf16.gmra.mrb[0].mxu0 %v915
    %v1104 = vpop.f32.mrb[0].mxu0
    %v1105 = vadd.f32 %v941, %v1104
    %v1106 = vpop.f32.mrb[0].mxu0
    %v1107 = vpop.f32.mrb[0].mxu0
    %v1108 = vadd.f32 %v941, %v1107
    %v1109 = vpop.f32.mrb[0].mxu0
    %1110 = vmatprep.mubr.bf16.mxu0 0
    %1111 = vmatmul.mubr.bf16.gmra.mrb[0].mxu0 %v916
    %v1112 = vpop.f32.mrb[0].mxu0
    %v1113 = vadd.f32 %v941, %v1112
    %v1114 = vpop.f32.mrb[0].mxu0
    %v1115 = vpop.f32.mrb[0].mxu0
    %v1116 = vadd.f32 %v941, %v1115
    %v1117 = vpop.f32.mrb[0].mxu0
    %1118 = vmatprep.mubr.bf16.mxu0 0
    %1119 = vmatmul.mubr.bf16.gmra.mrb[0].mxu0 %v917
    %v1120 = vpop.f32.mrb[0].mxu0
    %v1121 = vadd.f32 %v941, %v1120
    %v1122 = vpop.f32.mrb[0].mxu0
    %v1123 = vpop.f32.mrb[0].mxu0
    %v1124 = vadd.f32 %v941, %v1123
    %v1125 = vpop.f32.mrb[0].mxu0
    %1126 = vmatprep.mubr.bf16.mxu0 0
    %1127 = vmatmul.mubr.bf16.gmra.mrb[0].mxu0 %v918
    %v1128 = vpop.f32.mrb[0].mxu0
    %v1129 = vadd.f32 %v941, %v1128
    %v1130 = vpop.f32.mrb[0].mxu0
    %v1131 = vpop.f32.mrb[0].mxu0
    %v1132 = vadd.f32 %v941, %v1131
    %v1133 = vpop.f32.mrb[0].mxu0
    %1134 = vmatprep.mubr.bf16.mxu0 0
    %1135 = vmatmul.mubr.bf16.gmra.mrb[0].mxu0 %v919
    %v1136 = vpop.f32.mrb[0].mxu0
    %v1137 = vadd.f32 %v941, %v1136
    %v1138 = vpop.f32.mrb[0].mxu0
    %v1139 = vpop.f32.mrb[0].mxu0
    %v1140 = vadd.f32 %v941, %v1139
    %v1141 = vpop.f32.mrb[0].mxu0
    %1142 = vmatprep.mubr.bf16.mxu0 0
    %1143 = vmatmul.mubr.bf16.gmra.mrb[0].mxu0 %v920
    %v1144 = vpop.f32.mrb[0].mxu0
    %v1145 = vadd.f32 %v941, %v1144
    %v1146 = vpop.f32.mrb[0].mxu0
    %v1147 = vpop.f32.mrb[0].mxu0
    %v1148 = vadd.f32 %v941, %v1147
    %v1149 = vpop.f32.mrb[0].mxu0
    %1150 = vdwg.mxu0
    %v1151 = vmax.f32 %v1025, 0.0
    %v1152 = vmax.f32 %v1028, 0.0
    %v1153 = vmax.f32 %v1033, 0.0
    %v1154 = vmax.f32 %v1036, 0.0
    %v1155 = vmax.f32 %v1041, 0.0
    %v1156 = vmax.f32 %v1044, 0.0
    %v1157 = vmax.f32 %v1049, 0.0
    %v1158 = vmax.f32 %v1052, 0.0
    %v1159 = vmax.f32 %v1057, 0.0
    %v1160 = vmax.f32 %v1060, 0.0
    %v1161 = vmax.f32 %v1065, 0.0
    %v1162 = vmax.f32 %v1068, 0.0
    %v1163 = vmax.f32 %v1073, 0.0
    %v1164 = vmax.f32 %v1076, 0.0
    %v1165 = vmax.f32 %v1081, 0.0
    %v1166 = vmax.f32 %v1084, 0.0
    %v1167 = vmax.f32 %v1089, 0.0
    %v1168 = vmax.f32 %v1092, 0.0
    %v1169 = vmax.f32 %v1097, 0.0
    %v1170 = vmax.f32 %v1100, 0.0
    %v1171 = vmax.f32 %v1105, 0.0
    %v1172 = vmax.f32 %v1108, 0.0
    %v1173 = vmax.f32 %v1113, 0.0
    %v1174 = vmax.f32 %v1116, 0.0
    %v1175 = vmax.f32 %v1121, 0.0
    %v1176 = vmax.f32 %v1124, 0.0
    %v1177 = vmax.f32 %v1129, 0.0
    %v1178 = vmax.f32 %v1132, 0.0
    %v1179 = vmax.f32 %v1137, 0.0
    %v1180 = vmax.f32 %v1140, 0.0
    %v1181 = vmax.f32 %v1145, 0.0
    %v1182 = vmax.f32 %v1148, 0.0
    %v1183 = vpack.c.bf16 %v1152, %v1151
    %v1184 = vpack.c.bf16 %v1154, %v1153
    %v1185 = vpack.c.bf16 %v1156, %v1155
    %v1186 = vpack.c.bf16 %v1158, %v1157
    %v1187 = vpack.c.bf16 %v1160, %v1159
    %v1188 = vpack.c.bf16 %v1162, %v1161
    %v1189 = vpack.c.bf16 %v1164, %v1163
    %v1190 = vpack.c.bf16 %v1166, %v1165
    %v1191 = vpack.c.bf16 %v1168, %v1167
    %v1192 = vpack.c.bf16 %v1170, %v1169
    %v1193 = vpack.c.bf16 %v1172, %v1171
    %v1194 = vpack.c.bf16 %v1174, %v1173
    %v1195 = vpack.c.bf16 %v1176, %v1175
    %v1196 = vpack.c.bf16 %v1178, %v1177
    %v1197 = vpack.c.bf16 %v1180, %v1179
    %v1198 = vpack.c.bf16 %v1182, %v1181
    %v1199 = vld [vmem:[%s2 + $0x4] sm:$0xf]
    %v1200 = vld [vmem:[%s2 + $0xc] sm:$0xf]
    %v1201 = vld [vmem:[%s2 + $0x14] sm:$0xf]
    %v1202 = vld [vmem:[%s2 + $0x1c] sm:$0xf]
    %v1203 = vld [vmem:[%s2 + $0x24] sm:$0xf]
    %v1204 = vld [vmem:[%s2 + $0x2c] sm:$0xf]
    %v1205 = vld [vmem:[%s2 + $0x34] sm:$0xf]
    %v1206 = vld [vmem:[%s2 + $0x3c] sm:$0xf]
    %v1207 = vld [vmem:[%s2 + $0x44] sm:$0xf]
    %v1208 = vld [vmem:[%s2 + $0x4c] sm:$0xf]
    %v1209 = vld [vmem:[%s2 + $0x54] sm:$0xf]
    %v1210 = vld [vmem:[%s2 + $0x5c] sm:$0xf]
    %v1211 = vld [vmem:[%s2 + $0x64] sm:$0xf]
    %v1212 = vld [vmem:[%s2 + $0x6c] sm:$0xf]
    %v1213 = vld [vmem:[%s2 + $0x74] sm:$0xf]
    %v1214 = vld [vmem:[%s2 + $0x7c] sm:$0xf]
    %v1215 = vld [vmem:[%s1 + $0x6] sm:$0x1]
    %v1216 = vlaneseq
    %v1217 = vshrl.u32 %v1216, 7
    %v1218 = vsub.s32 0, %v1217
    %v1219 = vrot.slane %v1215, %v1218
    %v1236 = vunpack.c.l.b16 %v1199
    %v1237 = vunpack.c.l.b16 %v1200
    %v1238 = vunpack.c.l.b16 %v1201
    %v1239 = vunpack.c.l.b16 %v1202
    %v1240 = vunpack.c.l.b16 %v1203
    %v1241 = vunpack.c.l.b16 %v1204
    %v1242 = vunpack.c.l.b16 %v1205
    %v1243 = vunpack.c.l.b16 %v1206
    %v1244 = vunpack.c.l.b16 %v1207
    %v1245 = vunpack.c.l.b16 %v1208
    %v1246 = vunpack.c.l.b16 %v1209
    %v1247 = vunpack.c.l.b16 %v1210
    %v1248 = vunpack.c.l.b16 %v1211
    %v1249 = vunpack.c.l.b16 %v1212
    %v1250 = vunpack.c.l.b16 %v1213
    %v1251 = vunpack.c.l.b16 %v1214
    %v1252 = vpack.c.b16 %v1237, %v1236
    %v1253 = vpack.c.b16 %v1239, %v1238
    %v1254 = vpack.c.b16 %v1241, %v1240
    %v1255 = vpack.c.b16 %v1243, %v1242
    %v1256 = vpack.c.b16 %v1245, %v1244
    %v1257 = vpack.c.b16 %v1247, %v1246
    %v1258 = vpack.c.b16 %v1249, %v1248
    %v1259 = vpack.c.b16 %v1251, %v1250
    %1268 = vmatprep.subr.bf16.mxu0 0
    %1269 = vmatpush1.bf16.msra.mxu0 %v1252
    %1270 = vmatprep.subr.bf16.mxu0 0
    %1271 = vmatpush1.bf16.msra.mxu0 %v1253
    %1272 = vmatprep.subr.bf16.mxu0 0
    %1273 = vmatpush1.bf16.msra.mxu0 %v1254
    %1274 = vmatprep.subr.bf16.mxu0 0
    %1275 = vmatpush1.bf16.msra.mxu0 %v1255
    %1276 = vmatprep.subr.bf16.mxu0 0
    %1277 = vmatpush1.bf16.msra.mxu0 %v1256
    %1278 = vmatprep.subr.bf16.mxu0 0
    %1279 = vmatpush1.bf16.msra.mxu0 %v1257
    %1280 = vmatprep.subr.bf16.mxu0 0
    %1281 = vmatpush1.bf16.msra.mxu0 %v1258
    %1282 = vmatprep.subr.bf16.mxu0 0
    %1283 = vmatpush1.bf16.msra.mxu0 %v1259
    %1284 = vmatprep.subr.bf16.mxu0 0
    %1285 = vmatpush1.bf16.msra.mxu0 0
    %1286 = vmatprep.subr.bf16.mxu0 0
    %1287 = vmatpush1.bf16.msra.mxu0 0
    %1288 = vmatprep.subr.bf16.mxu0 0
    %1289 = vmatpush1.bf16.msra.mxu0 0
    %1290 = vmatprep.subr.bf16.mxu0 0
    %1291 = vmatpush1.bf16.msra.mxu0 0
    %1292 = vmatprep.subr.bf16.mxu0 0
    %1293 = vmatpush1.bf16.msra.mxu0 0
    %1294 = vmatprep.subr.bf16.mxu0 0
    %1295 = vmatpush1.bf16.msra.mxu0 0
    %1296 = vmatprep.subr.bf16.mxu0 0
    %1297 = vmatpush1.bf16.msra.mxu0 0
    %1298 = vmatprep.subr.bf16.mxu0 0
    %1299 = vmatpush1.bf16.msra.mxu0 0
    %1300 = vmatprep.mubr.bf16.mxu0 0
    %1301 = vmatmul.mubr.bf16.gmra.mrb[0].mxu0 %v1183
    %v1302 = vpop.f32.mrb[0].mxu0
    %v1303 = vadd.f32 %v1219, %v1302
    %v1304 = vpop.f32.mrb[0].mxu0
    %v1305 = vpop.f32.mrb[0].mxu0
    %v1306 = vadd.f32 %v1219, %v1305
    %v1307 = vpop.f32.mrb[0].mxu0
    %1308 = vmatprep.mubr.bf16.mxu0 0
    %1309 = vmatmul.mubr.bf16.gmra.mrb[0].mxu0 %v1184
    %v1310 = vpop.f32.mrb[0].mxu0
    %v1311 = vadd.f32 %v1219, %v1310
    %v1312 = vpop.f32.mrb[0].mxu0
    %v1313 = vpop.f32.mrb[0].mxu0
    %v1314 = vadd.f32 %v1219, %v1313
    %v1315 = vpop.f32.mrb[0].mxu0
    %1316 = vmatprep.mubr.bf16.mxu0 0
    %1317 = vmatmul.mubr.bf16.gmra.mrb[0].mxu0 %v1185
    %v1318 = vpop.f32.mrb[0].mxu0
    %v1319 = vadd.f32 %v1219, %v1318
    %v1320 = vpop.f32.mrb[0].mxu0
    %v1321 = vpop.f32.mrb[0].mxu0
    %v1322 = vadd.f32 %v1219, %v1321
    %v1323 = vpop.f32.mrb[0].mxu0
    %1324 = vmatprep.mubr.bf16.mxu0 0
    %1325 = vmatmul.mubr.bf16.gmra.mrb[0].mxu0 %v1186
    %v1326 = vpop.f32.mrb[0].mxu0
    %v1327 = vadd.f32 %v1219, %v1326
    %v1328 = vpop.f32.mrb[0].mxu0
    %v1329 = vpop.f32.mrb[0].mxu0
    %v1330 = vadd.f32 %v1219, %v1329
    %v1331 = vpop.f32.mrb[0].mxu0
    %1332 = vmatprep.mubr.bf16.mxu0 0
    %1333 = vmatmul.mubr.bf16.gmra.mrb[0].mxu0 %v1187
    %v1334 = vpop.f32.mrb[0].mxu0
    %v1335 = vadd.f32 %v1219, %v1334
    %v1336 = vpop.f32.mrb[0].mxu0
    %v1337 = vpop.f32.mrb[0].mxu0
    %v1338 = vadd.f32 %v1219, %v1337
    %v1339 = vpop.f32.mrb[0].mxu0
    %1340 = vmatprep.mubr.bf16.mxu0 0
    %1341 = vmatmul.mubr.bf16.gmra.mrb[0].mxu0 %v1188
    %v1342 = vpop.f32.mrb[0].mxu0
    %v1343 = vadd.f32 %v1219, %v1342
    %v1344 = vpop.f32.mrb[0].mxu0
    %v1345 = vpop.f32.mrb[0].mxu0
    %v1346 = vadd.f32 %v1219, %v1345
    %v1347 = vpop.f32.mrb[0].mxu0
    %1348 = vmatprep.mubr.bf16.mxu0 0
    %1349 = vmatmul.mubr.bf16.gmra.mrb[0].mxu0 %v1189
    %v1350 = vpop.f32.mrb[0].mxu0
    %v1351 = vadd.f32 %v1219, %v1350
    %v1352 = vpop.f32.mrb[0].mxu0
    %v1353 = vpop.f32.mrb[0].mxu0
    %v1354 = vadd.f32 %v1219, %v1353
    %v1355 = vpop.f32.mrb[0].mxu0
    %1356 = vmatprep.mubr.bf16.mxu0 0
    %1357 = vmatmul.mubr.bf16.gmra.mrb[0].mxu0 %v1190
    %v1358 = vpop.f32.mrb[0].mxu0
    %v1359 = vadd.f32 %v1219, %v1358
    %v1360 = vpop.f32.mrb[0].mxu0
    %v1361 = vpop.f32.mrb[0].mxu0
    %v1362 = vadd.f32 %v1219, %v1361
    %v1363 = vpop.f32.mrb[0].mxu0
    %1364 = vmatprep.mubr.bf16.mxu0 0
    %1365 = vmatmul.mubr.bf16.gmra.mrb[0].mxu0 %v1191
    %v1366 = vpop.f32.mrb[0].mxu0
    %v1367 = vadd.f32 %v1219, %v1366
    %v1368 = vpop.f32.mrb[0].mxu0
    %v1369 = vpop.f32.mrb[0].mxu0
    %v1370 = vadd.f32 %v1219, %v1369
    %v1371 = vpop.f32.mrb[0].mxu0
    %1372 = vmatprep.mubr.bf16.mxu0 0
    %1373 = vmatmul.mubr.bf16.gmra.mrb[0].mxu0 %v1192
    %v1374 = vpop.f32.mrb[0].mxu0
    %v1375 = vadd.f32 %v1219, %v1374
    %v1376 = vpop.f32.mrb[0].mxu0
    %v1377 = vpop.f32.mrb[0].mxu0
    %v1378 = vadd.f32 %v1219, %v1377
    %v1379 = vpop.f32.mrb[0].mxu0
    %1380 = vmatprep.mubr.bf16.mxu0 0
    %1381 = vmatmul.mubr.bf16.gmra.mrb[0].mxu0 %v1193
    %v1382 = vpop.f32.mrb[0].mxu0
    %v1383 = vadd.f32 %v1219, %v1382
    %v1384 = vpop.f32.mrb[0].mxu0
    %v1385 = vpop.f32.mrb[0].mxu0
    %v1386 = vadd.f32 %v1219, %v1385
    %v1387 = vpop.f32.mrb[0].mxu0
    %1388 = vmatprep.mubr.bf16.mxu0 0
    %1389 = vmatmul.mubr.bf16.gmra.mrb[0].mxu0 %v1194
    %v1390 = vpop.f32.mrb[0].mxu0
    %v1391 = vadd.f32 %v1219, %v1390
    %v1392 = vpop.f32.mrb[0].mxu0
    %v1393 = vpop.f32.mrb[0].mxu0
    %v1394 = vadd.f32 %v1219, %v1393
    %v1395 = vpop.f32.mrb[0].mxu0
    %1396 = vmatprep.mubr.bf16.mxu0 0
    %1397 = vmatmul.mubr.bf16.gmra.mrb[0].mxu0 %v1195
    %v1398 = vpop.f32.mrb[0].mxu0
    %v1399 = vadd.f32 %v1219, %v1398
    %v1400 = vpop.f32.mrb[0].mxu0
    %v1401 = vpop.f32.mrb[0].mxu0
    %v1402 = vadd.f32 %v1219, %v1401
    %v1403 = vpop.f32.mrb[0].mxu0
    %1404 = vmatprep.mubr.bf16.mxu0 0
    %1405 = vmatmul.mubr.bf16.gmra.mrb[0].mxu0 %v1196
    %v1406 = vpop.f32.mrb[0].mxu0
    %v1407 = vadd.f32 %v1219, %v1406
    %v1408 = vpop.f32.mrb[0].mxu0
    %v1409 = vpop.f32.mrb[0].mxu0
    %v1410 = vadd.f32 %v1219, %v1409
    %v1411 = vpop.f32.mrb[0].mxu0
    %1412 = vmatprep.mubr.bf16.mxu0 0
    %1413 = vmatmul.mubr.bf16.gmra.mrb[0].mxu0 %v1197
    %v1414 = vpop.f32.mrb[0].mxu0
    %v1415 = vadd.f32 %v1219, %v1414
    %v1416 = vpop.f32.mrb[0].mxu0
    %v1417 = vpop.f32.mrb[0].mxu0
    %v1418 = vadd.f32 %v1219, %v1417
    %v1419 = vpop.f32.mrb[0].mxu0
    %1420 = vmatprep.mubr.bf16.mxu0 0
    %1421 = vmatmul.mubr.bf16.gmra.mrb[0].mxu0 %v1198
    %v1422 = vpop.f32.mrb[0].mxu0
    %v1423 = vadd.f32 %v1219, %v1422
    %v1424 = vpop.f32.mrb[0].mxu0
    %v1425 = vpop.f32.mrb[0].mxu0
    %v1426 = vadd.f32 %v1219, %v1425
    %v1427 = vpop.f32.mrb[0].mxu0
    %1428 = vdwg.mxu0
    %1429 = vst [vmem:[#allocation2] sm:$0xff] %v1303
    %1430 = vst [vmem:[#allocation2 + $0x8] sm:$0xff] %v1306
    %1431 = vst [vmem:[#allocation2 + $0x10] sm:$0xff] %v1311
    %1432 = vst [vmem:[#allocation2 + $0x18] sm:$0xff] %v1314
    %1433 = vst [vmem:[#allocation2 + $0x20] sm:$0xff] %v1319
    %1434 = vst [vmem:[#allocation2 + $0x28] sm:$0xff] %v1322
    %1435 = vst [vmem:[#allocation2 + $0x30] sm:$0xff] %v1327
    %1436 = vst [vmem:[#allocation2 + $0x38] sm:$0xff] %v1330
    %1437 = vst [vmem:[#allocation2 + $0x40] sm:$0xff] %v1335
    %1438 = vst [vmem:[#allocation2 + $0x48] sm:$0xff] %v1338
    %1439 = vst [vmem:[#allocation2 + $0x50] sm:$0xff] %v1343
    %1440 = vst [vmem:[#allocation2 + $0x58] sm:$0xff] %v1346
    %1441 = vst [vmem:[#allocation2 + $0x60] sm:$0xff] %v1351
    %1442 = vst [vmem:[#allocation2 + $0x68] sm:$0xff] %v1354
    %1443 = vst [vmem:[#allocation2 + $0x70] sm:$0xff] %v1359
    %1444 = vst [vmem:[#allocation2 + $0x78] sm:$0xff] %v1362
    %1445 = vst [vmem:[#allocation2 + $0x80] sm:$0xff] %v1367
    %1446 = vst [vmem:[#allocation2 + $0x88] sm:$0xff] %v1370
    %1447 = vst [vmem:[#allocation2 + $0x90] sm:$0xff] %v1375
    %1448 = vst [vmem:[#allocation2 + $0x98] sm:$0xff] %v1378
    %1449 = vst [vmem:[#allocation2 + $0xa0] sm:$0xff] %v1383
    %1450 = vst [vmem:[#allocation2 + $0xa8] sm:$0xff] %v1386
    %1451 = vst [vmem:[#allocation2 + $0xb0] sm:$0xff] %v1391
    %1452 = vst [vmem:[#allocation2 + $0xb8] sm:$0xff] %v1394
    %1453 = vst [vmem:[#allocation2 + $0xc0] sm:$0xff] %v1399
    %1454 = vst [vmem:[#allocation2 + $0xc8] sm:$0xff] %v1402
    %1455 = vst [vmem:[#allocation2 + $0xd0] sm:$0xff] %v1407
    %1456 = vst [vmem:[#allocation2 + $0xd8] sm:$0xff] %v1410
    %1457 = vst [vmem:[#allocation2 + $0xe0] sm:$0xff] %v1415
    %1458 = vst [vmem:[#allocation2 + $0xe8] sm:$0xff] %v1418
    %1459 = vst [vmem:[#allocation2 + $0xf0] sm:$0xff] %v1423
    %1460 = vst [vmem:[#allocation2 + $0xf8] sm:$0xff] %v1426
    // Predicated region
    $region14: #{tpu_custom_call.1} parent=1 // pred_check
      _
    $region15: #{tpu_custom_call.1} parent=1 // pred_check_branch
      %1462 = sbr.rel (0) target = $region17
    $region16: #{tpu_custom_call.1} parent=1 // pred_region
      %s1464 = ssub.s32 4096, 4096
      %1465 = vsyncadd [#allocation3], %s1464
      %s1466 = sshll.u32 [#allocation2], 4
      %s1467 = int_to_ptr.vmem [resolvable:$true] %s1466
      %1472 = dma.vmem_to_hbm [thread:$0]  %s1467, 4096, %s3, [#allocation3], 128, 128, 8
    $region17: #{tpu_custom_call.1} parent=1 // pred_fallthru
      _
    // Predicated region
    $region18: #{tpu_custom_call.1} parent=1 // pred_check
      _
    $region19: #{tpu_custom_call.1} parent=1 // pred_check_branch
      %1474 = sbr.rel (0) target = $region21
    $region20: #{tpu_custom_call.1} parent=1 // pred_region
      %1475 = dma.done [#allocation3], 4096
    $region21: #{tpu_custom_call.1} parent=1 // pred_fallthru
      _
    %1476 = vsyncpa [#allocation3], 1

</llo_original>
